<compile_context>
chip_gen: v5e
topology: v5e:2x2
jax: 0.10.0
libtpu: 0.0.40
codegen_flags: <defaults>
</compile_context>

<pallas_src>
import math
import functools
import jax
import jax.numpy as jnp
from jax.experimental import pallas as pl
from jax.experimental.pallas import tpu as pltpu

_LANE = 128      # lane width on v5e / v6e / v7x
_SUBLANE = 8     # f32 sublane count


def _round_up(x, m):
    return (x + m - 1) // m * m


def _mlp_kernel(x_ref, w1_ref, b1_ref, w2_ref, b2_ref, w3_ref, b3_ref, o_ref,
                *, use_bf16):
    # One batch tile per grid step; weights stay resident in VMEM (index_map -> (0,0)).
    x = x_ref[...]
    w1 = w1_ref[...]
    w2 = w2_ref[...]
    w3 = w3_ref[...]
    if use_bf16:
        # bf16 MXU operands, f32 accumulation; bias/relu math stays f32
        # (v5e VPU has no bf16).
        x, w1, w2, w3 = (a.astype(jnp.bfloat16) for a in (x, w1, w2, w3))

    h1 = jnp.dot(x, w1, preferred_element_type=jnp.float32) + b1_ref[...]
    h1 = jnp.maximum(h1, 0.0)                                  # relu(fc1(x))
    if use_bf16:
        h1 = h1.astype(jnp.bfloat16)

    h2 = jnp.dot(h1, w2, preferred_element_type=jnp.float32) + b2_ref[...]
    h2 = jnp.maximum(h2, 0.0)                                  # relu(fc2(x))
    if use_bf16:
        h2 = h2.astype(jnp.bfloat16)

    out = jnp.dot(h2, w3, preferred_element_type=jnp.float32) + b3_ref[...]
    o_ref[...] = out.astype(o_ref.dtype)                       # fc3(x), no activation


def world_model_forward(x, params, *, use_bf16=False):
    """Pallas forward pass of WorldModel. x: [B, input_dim] f32."""
    w1, b1, w2, b2, w3, b3 = params
    B, d_in = x.shape
    h1_d, h2_d, d_out = w1.shape[1], w2.shape[1], w3.shape[1]

    # Lane-dense padded feature dims (exact through relu + matmul with zero pads).
    d_in_p = _round_up(d_in, _LANE)
    h1_p = _round_up(h1_d, _LANE)
    h2_p = _round_up(h2_d, _LANE)
    d_out_p = _round_up(d_out, _LANE)

    # Batch tiling: big tiles to fill the MXU at real batch sizes, rounded-up
    # batch for tiny demo batches (grid of 1). VMEM is never the constraint here.
    TILE_B = 256 if B >= 256 else _round_up(max(B, 1), _SUBLANE)
    B_p = _round_up(B, TILE_B)

    def pad2(a, rows, cols):
        return jnp.pad(a, ((0, rows - a.shape[0]), (0, cols - a.shape[1])))

    x_p = pad2(x, B_p, d_in_p)
    w1_p, b1_p = pad2(w1, d_in_p, h1_p), pad2(b1, 1, h1_p)
    w2_p, b2_p = pad2(w2, h1_p, h2_p), pad2(b2, 1, h2_p)
    w3_p, b3_p = pad2(w3, h2_p, d_out_p), pad2(b3, 1, d_out_p)

    def resident(shape):  # whole array, same block for every grid step
        return pl.BlockSpec(shape, lambda i: (0, 0))

    out_p = pl.pallas_call(
        functools.partial(_mlp_kernel, use_bf16=use_bf16),
        out_shape=jax.ShapeDtypeStruct((B_p, d_out_p), x.dtype),
        grid=(B_p // TILE_B,),
        in_specs=[
            pl.BlockSpec((TILE_B, d_in_p), lambda i: (i, 0)),   # x batch tile
            resident((d_in_p, h1_p)), resident((1, h1_p)),      # fc1
            resident((h1_p, h2_p)), resident((1, h2_p)),        # fc2
            resident((h2_p, d_out_p)), resident((1, d_out_p)),  # fc3
        ],
        out_specs=pl.BlockSpec((TILE_B, d_out_p), lambda i: (i, 0)),
        compiler_params=pltpu.CompilerParams(
            dimension_semantics=("parallel",),  # shards batch tiles across v7x's 2 TCs
        ),
    )(x_p, w1_p, b1_p, w2_p, b2_p, w3_p, b3_p)

    return out_p[:B, :d_out]


def init_params(key, input_dim, fc1_dims=64, fc2_dims=64, dtype=jnp.float32):
    """Deterministic init mimicking PyTorch nn.Linear default (U[-1/sqrt(fan_in), +])."""
    def linear(k, fan_in, fan_out):
        kw, kb = jax.random.split(k)
        bound = 1.0 / math.sqrt(fan_in)
        w = jax.random.uniform(kw, (fan_in, fan_out), dtype, -bound, bound)
        b = jax.random.uniform(kb, (1, fan_out), dtype, -bound, bound)
        return w, b

    k1, k2, k3 = jax.random.split(key, 3)
    w1, b1 = linear(k1, input_dim, fc1_dims)
    w2, b2 = linear(k2, fc1_dims, fc2_dims)
    w3, b3 = linear(k3, fc2_dims, input_dim)
    return (w1, b1, w2, b2, w3, b3)


def _reference_forward(x, params):
    w1, b1, w2, b2, w3, b3 = params
    h1 = jnp.maximum(x @ w1 + b1, 0.0)
    h2 = jnp.maximum(h1 @ w2 + b2, 0.0)
    return h2 @ w3 + b3


# TODO(synk): training path (Adam optimizer + MSELoss step) of WorldModel is not
# translated; only the forward pass is implemented as a Pallas kernel.

if __name__ == "__main__":
    key = jax.random.PRNGKey(0)
    k_x, k_p = jax.random.split(key)

    batch = 8
    input_dim = 4          # WorldModel(input_shape=(4,)) — e.g. a 4-dim env state
    x = jax.random.normal(k_x, (batch, input_dim), dtype=jnp.float32)
    params = init_params(k_p, input_dim)

    # Small-batch path (grid of 1 batch tile).
    out = jax.block_until_ready(world_model_forward(x, params))
    ref = _reference_forward(x, params)
    assert out.shape == (batch, input_dim)
    assert jnp.allclose(out, ref, atol=1e-5, rtol=1e-5)

    # Larger-batch path exercising the tiled, parallel batch grid (2 tiles of 256).
    x_big = jax.random.normal(k_x, (512, input_dim), dtype=jnp.float32)
    out_big = jax.block_until_ready(world_model_forward(x_big, params))
    ref_big = _reference_forward(x_big, params)
    assert out_big.shape == (512, input_dim)
    assert jnp.allclose(out_big, ref_big, atol=1e-5, rtol=1e-5)

    print("KERNEL_OK")
</pallas_src>

<mosaic_0001>
module attributes {stable_mosaic.version = 11 : i64} {
  func.func @_mlp_kernel(%arg0: i32, %arg1: memref<8x128xf32, #tpu.memory_space<vmem>>, %arg2: memref<128x128xf32, #tpu.memory_space<vmem>>, %arg3: memref<1x128xf32, #tpu.memory_space<vmem>>, %arg4: memref<128x128xf32, #tpu.memory_space<vmem>>, %arg5: memref<1x128xf32, #tpu.memory_space<vmem>>, %arg6: memref<128x128xf32, #tpu.memory_space<vmem>>, %arg7: memref<1x128xf32, #tpu.memory_space<vmem>>, %arg8: memref<8x128xf32, #tpu.memory_space<vmem>>) attributes {dimension_semantics = [#tpu.dimension_semantics<parallel>], iteration_bounds = array<i64: 1>, scalar_prefetch = 0 : i64, scratch_operands = 0 : i64, tpu.core_type = #tpu.core_type<tc>, window_params = [{transform_indices = @transform_0, window_bounds = array<i64: 8, 128>}, {pipeline_mode = #tpu.pipeline_mode<synchronous>, transform_indices = @transform_1, window_bounds = array<i64: 128, 128>}, {pipeline_mode = #tpu.pipeline_mode<synchronous>, transform_indices = @transform_2, window_bounds = array<i64: 1, 128>}, {pipeline_mode = #tpu.pipeline_mode<synchronous>, transform_indices = @transform_3, window_bounds = array<i64: 128, 128>}, {pipeline_mode = #tpu.pipeline_mode<synchronous>, transform_indices = @transform_4, window_bounds = array<i64: 1, 128>}, {pipeline_mode = #tpu.pipeline_mode<synchronous>, transform_indices = @transform_5, window_bounds = array<i64: 128, 128>}, {pipeline_mode = #tpu.pipeline_mode<synchronous>, transform_indices = @transform_6, window_bounds = array<i64: 1, 128>}, {transform_indices = @transform_7, window_bounds = array<i64: 8, 128>}]} {
    %c0 = arith.constant 0 : index
    %c0_0 = arith.constant 0 : index
    %0 = vector.load %arg1[%c0, %c0_0] : memref<8x128xf32, #tpu.memory_space<vmem>>, vector<8x128xf32>
    %c0_1 = arith.constant 0 : index
    %c0_2 = arith.constant 0 : index
    %1 = vector.load %arg2[%c0_1, %c0_2] : memref<128x128xf32, #tpu.memory_space<vmem>>, vector<128x128xf32>
    %c0_3 = arith.constant 0 : index
    %c0_4 = arith.constant 0 : index
    %2 = vector.load %arg4[%c0_3, %c0_4] : memref<128x128xf32, #tpu.memory_space<vmem>>, vector<128x128xf32>
    %c0_5 = arith.constant 0 : index
    %c0_6 = arith.constant 0 : index
    %3 = vector.load %arg6[%c0_5, %c0_6] : memref<128x128xf32, #tpu.memory_space<vmem>>, vector<128x128xf32>
    %cst = arith.constant dense<0.000000e+00> : vector<8x128xf32>
    %4 = tpu.matmul %0, %1, %cst {dimension_numbers = #tpu.dot_dimension_numbers<[1], [0], [0], [1], [0, 0, 1, 1], [], []>} : vector<8x128xf32>, vector<128x128xf32>, vector<8x128xf32> -> vector<8x128xf32>
    %c0_7 = arith.constant 0 : index
    %c0_8 = arith.constant 0 : index
    %5 = vector.load %arg3[%c0_7, %c0_8] : memref<1x128xf32, #tpu.memory_space<vmem>>, vector<1x128xf32>
    %6 = vector.broadcast %5 : vector<1x128xf32> to vector<8x128xf32>
    %7 = arith.addf %4, %6 : vector<8x128xf32>
    %cst_9 = arith.constant 0.000000e+00 : f32
    %8 = vector.broadcast %cst_9 : f32 to vector<8x128xf32>
    %9 = arith.maximumf %7, %8 : vector<8x128xf32>
    %cst_10 = arith.constant dense<0.000000e+00> : vector<8x128xf32>
    %10 = tpu.matmul %9, %2, %cst_10 {dimension_numbers = #tpu.dot_dimension_numbers<[1], [0], [0], [1], [0, 0, 1, 1], [], []>} : vector<8x128xf32>, vector<128x128xf32>, vector<8x128xf32> -> vector<8x128xf32>
    %c0_11 = arith.constant 0 : index
    %c0_12 = arith.constant 0 : index
    %11 = vector.load %arg5[%c0_11, %c0_12] : memref<1x128xf32, #tpu.memory_space<vmem>>, vector<1x128xf32>
    %12 = vector.broadcast %11 : vector<1x128xf32> to vector<8x128xf32>
    %13 = arith.addf %10, %12 : vector<8x128xf32>
    %cst_13 = arith.constant 0.000000e+00 : f32
    %14 = vector.broadcast %cst_13 : f32 to vector<8x128xf32>
    %15 = arith.maximumf %13, %14 : vector<8x128xf32>
    %cst_14 = arith.constant dense<0.000000e+00> : vector<8x128xf32>
    %16 = tpu.matmul %15, %3, %cst_14 {dimension_numbers = #tpu.dot_dimension_numbers<[1], [0], [0], [1], [0, 0, 1, 1], [], []>} : vector<8x128xf32>, vector<128x128xf32>, vector<8x128xf32> -> vector<8x128xf32>
    %c0_15 = arith.constant 0 : index
    %c0_16 = arith.constant 0 : index
    %17 = vector.load %arg7[%c0_15, %c0_16] : memref<1x128xf32, #tpu.memory_space<vmem>>, vector<1x128xf32>
    %18 = vector.broadcast %17 : vector<1x128xf32> to vector<8x128xf32>
    %19 = arith.addf %16, %18 : vector<8x128xf32>
    %c0_17 = arith.constant 0 : index
    %c0_18 = arith.constant 0 : index
    %20 = vector.load %arg8[%c0_17, %c0_18] : memref<8x128xf32, #tpu.memory_space<vmem>>, vector<8x128xf32>
    tpu.vector_store %arg8[%c0_17, %c0_18], %19 {strides = array<i32>} : memref<8x128xf32, #tpu.memory_space<vmem>>, vector<8x128xf32>,
    return
  }
  func.func @transform_0(%arg0: i32) -> (i32, i32) {
    %c0_i32 = arith.constant 0 : i32
    %c0_i32_0 = arith.constant 0 : i32
    return %arg0, %c0_i32 : i32, i32
  }
  func.func @transform_1(%arg0: i32) -> (i32, i32) {
    %c0_i32 = arith.constant 0 : i32
    %c0_i32_0 = arith.constant 0 : i32
    %c0_i32_1 = arith.constant 0 : i32
    return %c0_i32, %c0_i32_0 : i32, i32
  }
  func.func @transform_2(%arg0: i32) -> (i32, i32) {
    %c0_i32 = arith.constant 0 : i32
    %c0_i32_0 = arith.constant 0 : i32
    %c0_i32_1 = arith.constant 0 : i32
    return %c0_i32, %c0_i32_0 : i32, i32
  }
  func.func @transform_3(%arg0: i32) -> (i32, i32) {
    %c0_i32 = arith.constant 0 : i32
    %c0_i32_0 = arith.constant 0 : i32
    %c0_i32_1 = arith.constant 0 : i32
    return %c0_i32, %c0_i32_0 : i32, i32
  }
  func.func @transform_4(%arg0: i32) -> (i32, i32) {
    %c0_i32 = arith.constant 0 : i32
    %c0_i32_0 = arith.constant 0 : i32
    %c0_i32_1 = arith.constant 0 : i32
    return %c0_i32, %c0_i32_0 : i32, i32
  }
  func.func @transform_5(%arg0: i32) -> (i32, i32) {
    %c0_i32 = arith.constant 0 : i32
    %c0_i32_0 = arith.constant 0 : i32
    %c0_i32_1 = arith.constant 0 : i32
    return %c0_i32, %c0_i32_0 : i32, i32
  }
  func.func @transform_6(%arg0: i32) -> (i32, i32) {
    %c0_i32 = arith.constant 0 : i32
    %c0_i32_0 = arith.constant 0 : i32
    %c0_i32_1 = arith.constant 0 : i32
    return %c0_i32, %c0_i32_0 : i32, i32
  }
  func.func @transform_7(%arg0: i32) -> (i32, i32) {
    %c0_i32 = arith.constant 0 : i32
    %c0_i32_0 = arith.constant 0 : i32
    return %arg0, %c0_i32 : i32, i32
  }
}

</mosaic_0001>

<llo_original>
// kernel: tpu_custom_call.1
$region0: #{tpu_custom_call.1}
  #allocation0 [shape = 'u32[]', space=smem, size = 0x4, offset = 0x4, fixed_abs, tag = 'smem constant byte address 0x4 - core index']
  #allocation1 [shape = 'u32[72,128]{1,0:T(1,128)}', space=vmem, size = 0x9000, scoped, tag = 'internal scratch']
  %s0 = inlined_call_operand.hbm [shape: f32[8,128], index: 0, kind: input, shape index: {}]
  %s1 = inlined_call_operand.hbm [shape: f32[128,128], index: 1, kind: input, shape index: {}]
  %s2 = inlined_call_operand.vmem [shape: f32[1,128], index: 2, kind: input, shape index: {}]
  %s3 = inlined_call_operand.hbm [shape: f32[128,128], index: 3, kind: input, shape index: {}]
  %s4 = inlined_call_operand.vmem [shape: f32[1,128], index: 4, kind: input, shape index: {}]
  %s5 = inlined_call_operand.hbm [shape: f32[128,128], index: 5, kind: input, shape index: {}]
  %s6 = inlined_call_operand.vmem [shape: f32[1,128], index: 6, kind: input, shape index: {}]
  %s7 = inlined_call_operand.hbm [shape: f32[8,128], index: 7, kind: output, shape index: {}]
  %s8 = sld [smem:[#allocation0]]
  $region54: #{tpu_custom_call.1} parent=0
    _
  %s10 = ssub.s32 1, %s8
  %s11 = scalar_select 0, %s10, %s8
  $region1: #{tpu_custom_call.1} parent=0
    #allocation2 [shape = 'u8[4096]{0}', space=vmem, size = 0x1000, scoped, tag = 'input window, operand 0, single buffered']
    #allocation3 [shape = 's32[1]{0}', space=sflag, size = 0x4, scoped, tag = 'scoped memory for tpu_custom_call.1']
    #allocation4 [shape = 's32[1]{0}', space=sflag, size = 0x4, scoped, tag = 'scoped memory for tpu_custom_call.1']
    #allocation5 [shape = 'u8[65536]{0}', space=vmem, size = 0x10000, scoped, tag = 'input window, operand 1, single buffered']
    #allocation6 [shape = 's32[1]{0}', space=sflag, size = 0x4, scoped, tag = 'scoped memory for tpu_custom_call.1']
    #allocation7 [shape = 'u8[65536]{0}', space=vmem, size = 0x10000, scoped, tag = 'input window, operand 3, single buffered']
    #allocation8 [shape = 'u8[65536]{0}', space=vmem, size = 0x10000, scoped, tag = 'input window, operand 5, single buffered']
    #allocation9 [shape = 's32[1]{0}', space=sflag, size = 0x4, scoped, tag = 'scoped memory for tpu_custom_call.1']
    #allocation10 [shape = 'u8[4096]{0}', space=vmem, size = 0x1000, scoped, tag = 'output window, operand 0, single buffered']
    %12 = vsyncpa [#allocation3], 0
    %13 = vsyncpa [#allocation6], 0
    %14 = vsyncpa [#allocation9], 0
    %15 = vsyncpa [#allocation4], 0
    // Predicated region
    $region2: #{tpu_custom_call.1} parent=1 // pred_check
      _
    $region3: #{tpu_custom_call.1} parent=1 // pred_check_branch
      %17 = sbr.rel (0) target = $region5
    $region4: #{tpu_custom_call.1} parent=1 // pred_region
      %19 = vsyncadd [#allocation3], 0
      %s21 = sshll.u32 %s0, 4
      %s22 = int_to_ptr.hbm [resolvable:$true] %s21
      %s23 = sshll.u32 [#allocation2], 4
      %s24 = int_to_ptr.vmem [resolvable:$true] %s23
      %26 = dma.hbm_to_vmem [thread:$0]  %s22, 128, %s24, [#allocation3]
    $region5: #{tpu_custom_call.1} parent=1 // pred_fallthru
      _
    // Predicated region
    $region6: #{tpu_custom_call.1} parent=1 // pred_check
      _
    $region7: #{tpu_custom_call.1} parent=1 // pred_check_branch
      %28 = sbr.rel (0) target = $region9
    $region8: #{tpu_custom_call.1} parent=1 // pred_region
      %30 = vsyncadd [#allocation6], 0
      %s31 = sshll.u32 %s1, 4
      %s32 = int_to_ptr.hbm [resolvable:$true] %s31
      %s33 = sshll.u32 [#allocation5], 4
      %s34 = int_to_ptr.vmem [resolvable:$true] %s33
      %39 = dma.hbm_to_vmem [thread:$0]  %s32, 2048, %s34, [#allocation6], 128, 128, 8
    $region9: #{tpu_custom_call.1} parent=1 // pred_fallthru
      _
    // Predicated region
    $region10: #{tpu_custom_call.1} parent=1 // pred_check
      _
    $region11: #{tpu_custom_call.1} parent=1 // pred_check_branch
      %41 = sbr.rel (0) target = $region13
    $region12: #{tpu_custom_call.1} parent=1 // pred_region
      _
    $region13: #{tpu_custom_call.1} parent=1 // pred_fallthru
      _
    // Predicated region
    $region14: #{tpu_custom_call.1} parent=1 // pred_check
      _
    $region15: #{tpu_custom_call.1} parent=1 // pred_check_branch
      %43 = sbr.rel (0) target = $region17
    $region16: #{tpu_custom_call.1} parent=1 // pred_region
      %45 = vsyncadd [#allocation6], 0
      %s46 = sshll.u32 %s3, 4
      %s47 = int_to_ptr.hbm [resolvable:$true] %s46
      %s48 = sshll.u32 [#allocation7], 4
      %s49 = int_to_ptr.vmem [resolvable:$true] %s48
      %54 = dma.hbm_to_vmem [thread:$0]  %s47, 2048, %s49, [#allocation6], 128, 128, 8
    $region17: #{tpu_custom_call.1} parent=1 // pred_fallthru
      _
    // Predicated region
    $region18: #{tpu_custom_call.1} parent=1 // pred_check
      _
    $region19: #{tpu_custom_call.1} parent=1 // pred_check_branch
      %56 = sbr.rel (0) target = $region21
    $region20: #{tpu_custom_call.1} parent=1 // pred_region
      _
    $region21: #{tpu_custom_call.1} parent=1 // pred_fallthru
      _
    // Predicated region
    $region22: #{tpu_custom_call.1} parent=1 // pred_check
      _
    $region23: #{tpu_custom_call.1} parent=1 // pred_check_branch
      %58 = sbr.rel (0) target = $region25
    $region24: #{tpu_custom_call.1} parent=1 // pred_region
      %60 = vsyncadd [#allocation9], 0
      %s61 = sshll.u32 %s5, 4
      %s62 = int_to_ptr.hbm [resolvable:$true] %s61
      %s63 = sshll.u32 [#allocation8], 4
      %s64 = int_to_ptr.vmem [resolvable:$true] %s63
      %69 = dma.hbm_to_vmem [thread:$0]  %s62, 2048, %s64, [#allocation9], 128, 128, 8
    $region25: #{tpu_custom_call.1} parent=1 // pred_fallthru
      _
    // Predicated region
    $region26: #{tpu_custom_call.1} parent=1 // pred_check
      _
    $region27: #{tpu_custom_call.1} parent=1 // pred_check_branch
      %71 = sbr.rel (0) target = $region29
    $region28: #{tpu_custom_call.1} parent=1 // pred_region
      _
    $region29: #{tpu_custom_call.1} parent=1 // pred_fallthru
      _
    // Predicated region
    $region30: #{tpu_custom_call.1} parent=1 // pred_check
      _
    $region31: #{tpu_custom_call.1} parent=1 // pred_check_branch
      %73 = sbr.rel (0) target = $region33
    $region32: #{tpu_custom_call.1} parent=1 // pred_region
      %75 = dma.done [#allocation3], 128
    $region33: #{tpu_custom_call.1} parent=1 // pred_fallthru
      _
    // Predicated region
    $region34: #{tpu_custom_call.1} parent=1 // pred_check
      _
    $region35: #{tpu_custom_call.1} parent=1 // pred_check_branch
      %77 = sbr.rel (0) target = $region37
    $region36: #{tpu_custom_call.1} parent=1 // pred_region
      %79 = dma.done [#allocation6], 2048
    $region37: #{tpu_custom_call.1} parent=1 // pred_fallthru
      _
    // Predicated region
    $region38: #{tpu_custom_call.1} parent=1 // pred_check
      _
    $region39: #{tpu_custom_call.1} parent=1 // pred_check_branch
      %81 = sbr.rel (0) target = $region41
    $region40: #{tpu_custom_call.1} parent=1 // pred_region
      %83 = dma.done [#allocation6], 2048
    $region41: #{tpu_custom_call.1} parent=1 // pred_fallthru
      _
    // Predicated region
    $region42: #{tpu_custom_call.1} parent=1 // pred_check
      _
    $region43: #{tpu_custom_call.1} parent=1 // pred_check_branch
      %85 = sbr.rel (0) target = $region45
    $region44: #{tpu_custom_call.1} parent=1 // pred_region
      %87 = dma.done [#allocation9], 2048
    $region45: #{tpu_custom_call.1} parent=1 // pred_fallthru
      _
    %v88 = vld [vmem:[#allocation2] sm:$0xff]
    %v89 = vld [vmem:[#allocation5] sm:$0xff]
    %v90 = vld [vmem:[#allocation5 + $0x8] sm:$0xff]
    %v91 = vld [vmem:[#allocation5 + $0x10] sm:$0xff]
    %v92 = vld [vmem:[#allocation5 + $0x18] sm:$0xff]
    %v93 = vld [vmem:[#allocation5 + $0x20] sm:$0xff]
    %v94 = vld [vmem:[#allocation5 + $0x28] sm:$0xff]
    %v95 = vld [vmem:[#allocation5 + $0x30] sm:$0xff]
    %v96 = vld [vmem:[#allocation5 + $0x38] sm:$0xff]
    %v97 = vld [vmem:[#allocation5 + $0x40] sm:$0xff]
    %v98 = vld [vmem:[#allocation5 + $0x48] sm:$0xff]
    %v99 = vld [vmem:[#allocation5 + $0x50] sm:$0xff]
    %v100 = vld [vmem:[#allocation5 + $0x58] sm:$0xff]
    %v101 = vld [vmem:[#allocation5 + $0x60] sm:$0xff]
    %v102 = vld [vmem:[#allocation5 + $0x68] sm:$0xff]
    %v103 = vld [vmem:[#allocation5 + $0x70] sm:$0xff]
    %v104 = vld [vmem:[#allocation5 + $0x78] sm:$0xff]
    %v105 = vld [vmem:[#allocation7] sm:$0xff]
    %v106 = vld [vmem:[#allocation7 + $0x8] sm:$0xff]
    %v107 = vld [vmem:[#allocation7 + $0x10] sm:$0xff]
    %v108 = vld [vmem:[#allocation7 + $0x18] sm:$0xff]
    %v109 = vld [vmem:[#allocation7 + $0x20] sm:$0xff]
    %v110 = vld [vmem:[#allocation7 + $0x28] sm:$0xff]
    %v111 = vld [vmem:[#allocation7 + $0x30] sm:$0xff]
    %v112 = vld [vmem:[#allocation7 + $0x38] sm:$0xff]
    %v113 = vld [vmem:[#allocation7 + $0x40] sm:$0xff]
    %v114 = vld [vmem:[#allocation7 + $0x48] sm:$0xff]
    %v115 = vld [vmem:[#allocation7 + $0x50] sm:$0xff]
    %v116 = vld [vmem:[#allocation7 + $0x58] sm:$0xff]
    %v117 = vld [vmem:[#allocation7 + $0x60] sm:$0xff]
    %v118 = vld [vmem:[#allocation7 + $0x68] sm:$0xff]
    %v119 = vld [vmem:[#allocation7 + $0x70] sm:$0xff]
    %v120 = vld [vmem:[#allocation7 + $0x78] sm:$0xff]
    %v121 = vld [vmem:[#allocation8] sm:$0xff]
    %v122 = vld [vmem:[#allocation8 + $0x8] sm:$0xff]
    %v123 = vld [vmem:[#allocation8 + $0x10] sm:$0xff]
    %v124 = vld [vmem:[#allocation8 + $0x18] sm:$0xff]
    %v125 = vld [vmem:[#allocation8 + $0x20] sm:$0xff]
    %v126 = vld [vmem:[#allocation8 + $0x28] sm:$0xff]
    %v127 = vld [vmem:[#allocation8 + $0x30] sm:$0xff]
    %v128 = vld [vmem:[#allocation8 + $0x38] sm:$0xff]
    %v129 = vld [vmem:[#allocation8 + $0x40] sm:$0xff]
    %v130 = vld [vmem:[#allocation8 + $0x48] sm:$0xff]
    %v131 = vld [vmem:[#allocation8 + $0x50] sm:$0xff]
    %v132 = vld [vmem:[#allocation8 + $0x58] sm:$0xff]
    %v133 = vld [vmem:[#allocation8 + $0x60] sm:$0xff]
    %v134 = vld [vmem:[#allocation8 + $0x68] sm:$0xff]
    %v135 = vld [vmem:[#allocation8 + $0x70] sm:$0xff]
    %v136 = vld [vmem:[#allocation8 + $0x78] sm:$0xff]
    %v137 = vld [vmem:[%s2] sm:$0x1]
    %v139 = vperm.slane %v137, 0
    %141 = vmatpush.msra.mxu0 %v104
    %142 = vmatpush.msra.mxu0 %v103
    %143 = vmatpush.msra.mxu0 %v102
    %144 = vmatpush.msra.mxu0 %v101
    %145 = vmatpush.msra.mxu0 %v100
    %146 = vmatpush.msra.mxu0 %v99
    %147 = vmatpush.msra.mxu0 %v98
    %148 = vmatpush.msra.mxu0 %v97
    %149 = vmatpush.msra.mxu0 %v96
    %150 = vmatpush.msra.mxu0 %v95
    %151 = vmatpush.msra.mxu0 %v94
    %152 = vmatpush.msra.mxu0 %v93
    %153 = vmatpush.msra.mxu0 %v92
    %154 = vmatpush.msra.mxu0 %v91
    %155 = vmatpush.msra.mxu0 %v90
    %156 = vmatpush.msra.mxu0 %v89
    %157 = vmatmul.f32.gmra.mxu0 %v88
    %v158 = vpop.f32.mrf.mxu0
    %v159 = vadd.f32 %v139, %v158
    %160 = vdwg.mxu0
    %v161 = vmax.f32 %v159, 0.0
    %v162 = vld [vmem:[%s4] sm:$0x1]
    %v164 = vperm.slane %v162, 0
    %166 = vmatpush.msra.mxu0 %v120
    %167 = vmatpush.msra.mxu0 %v119
    %168 = vmatpush.msra.mxu0 %v118
    %169 = vmatpush.msra.mxu0 %v117
    %170 = vmatpush.msra.mxu0 %v116
    %171 = vmatpush.msra.mxu0 %v115
    %172 = vmatpush.msra.mxu0 %v114
    %173 = vmatpush.msra.mxu0 %v113
    %174 = vmatpush.msra.mxu0 %v112
    %175 = vmatpush.msra.mxu0 %v111
    %176 = vmatpush.msra.mxu0 %v110
    %177 = vmatpush.msra.mxu0 %v109
    %178 = vmatpush.msra.mxu0 %v108
    %179 = vmatpush.msra.mxu0 %v107
    %180 = vmatpush.msra.mxu0 %v106
    %181 = vmatpush.msra.mxu0 %v105
    %182 = vmatmul.f32.gmra.mxu0 %v161
    %v183 = vpop.f32.mrf.mxu0
    %v184 = vadd.f32 %v164, %v183
    %185 = vdwg.mxu0
    %v186 = vmax.f32 %v184, 0.0
    %v187 = vld [vmem:[%s6] sm:$0x1]
    %v189 = vperm.slane %v187, 0
    %191 = vmatpush.msra.mxu0 %v136
    %192 = vmatpush.msra.mxu0 %v135
    %193 = vmatpush.msra.mxu0 %v134
    %194 = vmatpush.msra.mxu0 %v133
    %195 = vmatpush.msra.mxu0 %v132
    %196 = vmatpush.msra.mxu0 %v131
    %197 = vmatpush.msra.mxu0 %v130
    %198 = vmatpush.msra.mxu0 %v129
    %199 = vmatpush.msra.mxu0 %v128
    %200 = vmatpush.msra.mxu0 %v127
    %201 = vmatpush.msra.mxu0 %v126
    %202 = vmatpush.msra.mxu0 %v125
    %203 = vmatpush.msra.mxu0 %v124
    %204 = vmatpush.msra.mxu0 %v123
    %205 = vmatpush.msra.mxu0 %v122
    %206 = vmatpush.msra.mxu0 %v121
    %207 = vmatmul.f32.gmra.mxu0 %v186
    %v208 = vpop.f32.mrf.mxu0
    %v209 = vadd.f32 %v189, %v208
    %210 = vdwg.mxu0
    %211 = vst [vmem:[#allocation10] sm:$0xff] %v209
    // Predicated region
    $region46: #{tpu_custom_call.1} parent=1 // pred_check
      _
    $region47: #{tpu_custom_call.1} parent=1 // pred_check_branch
      %213 = sbr.rel (0) target = $region49
    $region48: #{tpu_custom_call.1} parent=1 // pred_region
      %215 = vsyncadd [#allocation4], 0
      %s217 = sshll.u32 [#allocation10], 4
      %s218 = int_to_ptr.vmem [resolvable:$true] %s217
      %s219 = sshll.u32 %s7, 4
      %s220 = int_to_ptr.hbm [resolvable:$true] %s219
      %222 = dma.vmem_to_hbm [thread:$0]  %s218, 128, %s220, [#allocation4]
    $region49: #{tpu_custom_call.1} parent=1 // pred_fallthru
      _
    // Predicated region
    $region50: #{tpu_custom_call.1} parent=1 // pred_check
      _
    $region51: #{tpu_custom_call.1} parent=1 // pred_check_branch
      %224 = sbr.rel (0) target = $region53
    $region52: #{tpu_custom_call.1} parent=1 // pred_region
      %226 = dma.done [#allocation4], 128
    $region53: #{tpu_custom_call.1} parent=1 // pred_fallthru
      _
    %227 = vsyncpa [#allocation3], 1
    %228 = vsyncpa [#allocation6], 1
    %229 = vsyncpa [#allocation9], 1
    %230 = vsyncpa [#allocation4], 1

</llo_original>
